<compile_context>
chip_gen: v7x
topology: tpu7x:2x2x1
jax: 0.10.0
libtpu: 0.0.40
codegen_flags: <defaults>
</compile_context>

<pallas_src>
import math

import jax
import jax.numpy as jnp
from jax.experimental import pallas as pl
from jax.experimental.pallas import tpu as pltpu


# One x block in VMEM. 4 MiB keeps per-grid-step overhead well amortized on
# v7x's faster HBM while the double-buffered working set stays far under the
# scoped-VMEM cap below on every generation (v5e/v6e/v7x).
_DEFAULT_BLOCK_BYTES = 4 << 20

# Never request the whole physical per-TC VMEM (64 MiB on v7x); leave room
# for Mosaic internal scratch and dtype-upcast temporaries.
_VMEM_LIMIT_CAP = 48 << 20


def _round_up(x: int, m: int) -> int:
    return ((x + m - 1) // m) * m


def _sublane_multiple(itemsize: int) -> int:
    # (8,128) vreg tiling packs sub-32-bit dtypes along sublanes:
    # f32 -> 8 rows, bf16 -> 16, int8/fp8 -> 32.
    return max(8, 32 // itemsize)


def _lane_fold_factor(rows: int, hidden: int) -> int:
    """k with rows % k == 0 and (k*hidden) % 128 == 0; 1 if impossible."""
    if hidden % 128 == 0:
        return 1
    k = 128 // math.gcd(hidden, 128)
    return k if rows % k == 0 else 1


def _layer_scale_kernel(x_ref, w_ref, o_ref):
    # Match PyTorch: compute in the weight's dtype, cast back to x's dtype.
    xw = x_ref[...].astype(w_ref.dtype) * w_ref[...]
    o_ref[...] = xw.astype(o_ref.dtype)


def _layer_scale_scalar_kernel(x_ref, w_ref, o_ref):
    w = w_ref[0, 0]  # scalar weight lives in SMEM
    xw = x_ref[...].astype(w.dtype) * w
    o_ref[...] = xw.astype(o_ref.dtype)


def _choose_tiles(rows: int, hidden: int, itemsize: int, target_bytes: int):
    """Pick (tile_rows, tile_hidden) so one *physical* x block ~ target_bytes."""
    sub = _sublane_multiple(itemsize)
    padded_h = _round_up(hidden, 128)
    # Tile hidden only when a single sublane-stripe of the (lane-padded)
    # hidden extent already blows the budget; keep th a multiple of 128 so
    # output stores stay lane-dense (unmasked vst).
    if hidden <= 128 or sub * padded_h * itemsize <= target_bytes:
        th = hidden
    else:
        th = max(128, min(hidden,
                          (target_bytes // (sub * itemsize)) // 128 * 128))
    padded_th = _round_up(th, 128)
    # Rows: largest sublane multiple that keeps the padded block under
    # budget; small inputs use the full row extent (single block).
    tr_cap = max(sub, (target_bytes // (padded_th * itemsize)) // sub * sub)
    tr = rows if rows <= tr_cap else tr_cap
    return tr, th


def _vmem_limit_bytes(tr: int, th: int, x_itemsize: int, w_itemsize: int) -> int:
    """Scoped VMEM request with (8,128) padding + upcast-intermediate headroom."""
    padded_th = _round_up(th, 128)
    padded_tr = _round_up(tr, _sublane_multiple(x_itemsize))
    x_block = padded_tr * padded_th * x_itemsize          # physical bytes
    w_block = 8 * padded_th * max(w_itemsize, 4)          # sublane-padded row
    upcast_tmp = padded_tr * padded_th * 4                # f32 intermediate
    limit = 4 * x_block + 2 * w_block + upcast_tmp + (4 << 20)
    return int(min(limit, _VMEM_LIMIT_CAP))


def layer_scale(x: jax.Array, weight: jax.Array, *,
                target_block_bytes: int = _DEFAULT_BLOCK_BYTES,
                donate_x: bool = False) -> jax.Array:
    """Applies y = weight * x with broadcasting over the last axis.

    x:      [..., hidden]
    weight: [hidden], [1], or scalar
    Returns an array with x's original shape and dtype.
    """
    orig_shape = x.shape
    orig_dtype = x.dtype
    hidden = orig_shape[-1] if x.ndim else 1
    rows = 1
    for d in orig_shape[:-1]:
        rows *= d

    weight = jnp.asarray(weight)
    w_dtype = weight.dtype
    x_itemsize = jnp.dtype(orig_dtype).itemsize
    w_itemsize = jnp.dtype(w_dtype).itemsize

    # Fold rows into the lane axis when hidden is not lane-dense so stores are
    # unmasked and VMEM tiles aren't padded 4x. Pure reshape (row-major).
    k = _lane_fold_factor(rows, hidden)
    rows_f, hidden_f = rows // k, hidden * k
    x2d = x.reshape(rows_f, hidden_f)

    tr, th = _choose_tiles(rows_f, hidden_f, x_itemsize, target_block_bytes)
    # rows innermost: weight block index constant across consecutive steps.
    grid = (pl.cdiv(hidden_f, th), pl.cdiv(rows_f, tr))

    compiler_params = pltpu.CompilerParams(
        # rows (inner) is the megacore-sharded axis on v7x; hidden (outer)
        # stays "arbitrary" so each core keeps its weight tile resident.
        dimension_semantics=("arbitrary", "parallel"),
        vmem_limit_bytes=_vmem_limit_bytes(tr, th, x_itemsize, w_itemsize),
    )

    # Scalar weight (hidden_size=None): pass through SMEM, no broadcast row
    # in HBM and no per-tile weight DMA. Only for 32-bit weight dtypes
    # (SMEM is 32-bit scalar memory).
    use_smem_scalar = (weight.size == 1) and (w_itemsize == 4)

    if use_smem_scalar:
        kernel = _layer_scale_scalar_kernel
        w_arg = weight.reshape(1, 1)
        w_spec = pl.BlockSpec(memory_space=pltpu.MemorySpace.SMEM)
    else:
        kernel = _layer_scale_kernel
        w_row = jnp.broadcast_to(weight.reshape(-1), (hidden,)).reshape(1, hidden)
        if k > 1:
            w_row = jnp.tile(w_row, (1, k))
        w_arg = w_row
        w_spec = pl.BlockSpec((1, th), lambda j, i: (0, j))

    out = pl.pallas_call(
        kernel,
        out_shape=jax.ShapeDtypeStruct((rows_f, hidden_f), orig_dtype),
        grid_spec=pltpu.PrefetchScalarGridSpec(
            num_scalar_prefetch=0,
            grid=grid,
            in_specs=[
                pl.BlockSpec((tr, th), lambda j, i: (i, j)),
                w_spec,
            ],
            out_specs=pl.BlockSpec((tr, th), lambda j, i: (i, j)),
        ),
        compiler_params=compiler_params,
        input_output_aliases=({0: 0} if donate_x else {}),
    )(x2d, w_arg)

    return out.reshape(orig_shape)


class LayerScale:
    """JAX/Pallas equivalent of the PyTorch LayerScale module (forward only)."""

    def __init__(self, hidden_size=None, initial_value: float = 1.0,
                 dtype=jnp.float32, sequence_parallel: bool = False):
        if hidden_size is None:
            self.weight = jnp.full((1,), initial_value, dtype=dtype)
        else:
            self.weight = jnp.full((hidden_size,), initial_value, dtype=dtype)
        self.sequence_parallel = sequence_parallel  # forward semantics unaffected
        self.initial_value = initial_value
        # TODO(synk): backward all-reduce path (_reduce) is distributed-training-only; not needed for forward.

    def __call__(self, x: jax.Array) -> jax.Array:
        return layer_scale(x, self.weight)


def _ref(x, w):
    w = jnp.broadcast_to(jnp.asarray(w).reshape(-1), (x.shape[-1],))
    return (x.astype(w.dtype) * w).astype(x.dtype)


if __name__ == "__main__":
    key = jax.random.PRNGKey(0)
    k1, k2, k3, k4 = jax.random.split(key, 4)

    # Case 1: bf16 x, f32 per-channel weight (dtype-cast path), lane-dense hidden.
    x1 = jax.random.normal(k1, (2, 8, 128), jnp.float32).astype(jnp.bfloat16)
    m1 = LayerScale(hidden_size=128, initial_value=0.5, dtype=jnp.float32)
    m1.weight = (jnp.arange(128, dtype=jnp.float32) % 7 + 1.0) * 0.1
    y1 = jax.block_until_ready(m1(x1))
    r1 = _ref(x1, m1.weight)
    assert y1.shape == x1.shape and y1.dtype == x1.dtype
    assert jnp.allclose(y1.astype(jnp.float32), r1.astype(jnp.float32),
                        atol=1e-2, rtol=1e-2)

    # Case 2: ragged row count + tiny block budget -> cdiv grid with a
    # partial (masked) last row block.
    x2 = jax.random.normal(k2, (3, 7, 128), jnp.float32)
    y2 = jax.block_until_ready(
        layer_scale(x2, m1.weight, target_block_bytes=4096))
    r2 = _ref(x2, m1.weight)
    assert y2.shape == x2.shape and y2.dtype == x2.dtype
    assert jnp.allclose(y2, r2, atol=1e-5, rtol=1e-5)

    # Case 3: hidden_size=None (scalar weight via SMEM) with hidden=32;
    # rows fold into the lane axis (k=4 -> lane width 128).
    x3 = jax.random.normal(k3, (2, 8, 32), jnp.float32).astype(jnp.bfloat16)
    m3 = LayerScale(hidden_size=None, initial_value=0.25, dtype=jnp.float32)
    y3 = jax.block_until_ready(m3(x3))
    r3 = _ref(x3, m3.weight)
    assert y3.shape == x3.shape and y3.dtype == x3.dtype
    assert jnp.allclose(y3.astype(jnp.float32), r3.astype(jnp.float32),
                        atol=1e-2, rtol=1e-2)

    # Case 4: per-channel weight with hidden=32 -> lane folding + tiled weight row.
    x4 = jax.random.normal(k4, (4, 8, 32), jnp.float32)
    w4 = (jnp.arange(32, dtype=jnp.float32) - 16.0) * 0.05
    y4 = jax.block_until_ready(layer_scale(x4, w4))
    r4 = _ref(x4, w4)
    assert y4.shape == x4.shape and y4.dtype == x4.dtype
    assert jnp.allclose(y4, r4, atol=1e-5, rtol=1e-5)

    print("KERNEL_OK")
</pallas_src>

<mosaic_0001>
module attributes {stable_mosaic.version = 11 : i64} {
  func.func @_layer_scale_kernel(%arg0: i32, %arg1: i32, %arg2: memref<16x128xbf16, #tpu.memory_space<vmem>>, %arg3: memref<1x128xf32, #tpu.memory_space<vmem>>, %arg4: memref<16x128xbf16, #tpu.memory_space<vmem>>) attributes {dimension_semantics = [#tpu.dimension_semantics<arbitrary>, #tpu.dimension_semantics<parallel>], iteration_bounds = array<i64: 1, 1>, scalar_prefetch = 0 : i64, scratch_operands = 0 : i64, tpu.core_type = #tpu.core_type<tc>, window_params = [{transform_indices = @transform_0, window_bounds = array<i64: 16, 128>}, {transform_indices = @transform_1, window_bounds = array<i64: 1, 128>}, {transform_indices = @transform_2, window_bounds = array<i64: 16, 128>}]} {
    %c0 = arith.constant 0 : index
    %c0_0 = arith.constant 0 : index
    %0 = vector.load %arg2[%c0, %c0_0] : memref<16x128xbf16, #tpu.memory_space<vmem>>, vector<16x128xbf16>
    %1 = arith.extf %0 : vector<16x128xbf16> to vector<16x128xf32>
    %c0_1 = arith.constant 0 : index
    %c0_2 = arith.constant 0 : index
    %2 = vector.load %arg3[%c0_1, %c0_2] : memref<1x128xf32, #tpu.memory_space<vmem>>, vector<1x128xf32>
    %3 = vector.broadcast %2 : vector<1x128xf32> to vector<16x128xf32>
    %4 = arith.mulf %1, %3 : vector<16x128xf32>
    %5 = arith.truncf %4 : vector<16x128xf32> to vector<16x128xbf16>
    %c0_3 = arith.constant 0 : index
    %c0_4 = arith.constant 0 : index
    %6 = vector.load %arg4[%c0_3, %c0_4] : memref<16x128xbf16, #tpu.memory_space<vmem>>, vector<16x128xbf16>
    tpu.vector_store %arg4[%c0_3, %c0_4], %5 {strides = array<i32>} : memref<16x128xbf16, #tpu.memory_space<vmem>>, vector<16x128xbf16>,
    return
  }
  func.func @transform_0(%arg0: i32, %arg1: i32) -> (i32, i32) {
    %c0_i32 = arith.constant 0 : i32
    return %arg1, %arg0 : i32, i32
  }
  func.func @transform_1(%arg0: i32, %arg1: i32) -> (i32, i32) {
    %c0_i32 = arith.constant 0 : i32
    %c0_i32_0 = arith.constant 0 : i32
    return %c0_i32, %arg0 : i32, i32
  }
  func.func @transform_2(%arg0: i32, %arg1: i32) -> (i32, i32) {
    %c0_i32 = arith.constant 0 : i32
    return %arg1, %arg0 : i32, i32
  }
}

</mosaic_0001>

<llo_original>
// kernel: tpu_custom_call.1
$region0: #{tpu_custom_call.1}
  #allocation0 [shape = 'u32[]', space=smem, size = 0x4, offset = 0x4, fixed_abs, tag = 'smem constant byte address 0x4 - core index']
  #allocation1 [shape = 'u32[144,128]{1,0:T(1,128)}', space=vmem, size = 0x12000, scoped, tag = 'internal scratch']
  %s0 = inlined_call_operand.hbm [shape: bf16[16,128], index: 0, kind: input, shape index: {}]
  %s1 = inlined_call_operand.vmem [shape: f32[1,128], index: 1, kind: input, shape index: {}]
  %s2 = inlined_call_operand.hbm [shape: bf16[16,128], index: 2, kind: output, shape index: {}]
  %s3 = sld [smem:[#allocation0]]
  $region22: #{tpu_custom_call.1} parent=0
    _
  %s5 = ssub.s32 1, %s3
  %s6 = scalar_select 0, %s5, %s3
  $region1: #{tpu_custom_call.1} parent=0
    #allocation2 [shape = 'u8[4096]{0}', space=vmem, size = 0x1000, scoped, tag = 'input window, operand 0, single buffered']
    #allocation3 [shape = 's32[1]{0}', space=sflag, size = 0x4, scoped, tag = 'scoped memory for tpu_custom_call.1']
    #allocation4 [shape = 's32[1]{0}', space=sflag, size = 0x4, scoped, tag = 'scoped memory for tpu_custom_call.1']
    #allocation5 [shape = 'u8[4096]{0}', space=vmem, size = 0x1000, scoped, tag = 'output window, operand 0, single buffered']
    %7 = vsyncpa [#allocation3], 0
    %8 = vsyncpa [#allocation4], 0
    // Predicated region
    $region2: #{tpu_custom_call.1} parent=1 // pred_check
      _
    $region3: #{tpu_custom_call.1} parent=1 // pred_check_branch
      %10 = sbr.rel (0) target = $region5
    $region4: #{tpu_custom_call.1} parent=1 // pred_region
      %s12 = ssub.s32 128, 128
      %13 = vsyncadd [#allocation3], %s12
      %s14 = sshll.u32 [#allocation2], 4
      %s15 = int_to_ptr.vmem [resolvable:$true] %s14
      %20 = dma.hbm_to_vmem [thread:$0]  %s0, 128, %s15, [#allocation3], 64, 64, 4
    $region5: #{tpu_custom_call.1} parent=1 // pred_fallthru
      _
    // Predicated region
    $region6: #{tpu_custom_call.1} parent=1 // pred_check
      _
    $region7: #{tpu_custom_call.1} parent=1 // pred_check_branch
      %22 = sbr.rel (0) target = $region9
    $region8: #{tpu_custom_call.1} parent=1 // pred_region
      _
    $region9: #{tpu_custom_call.1} parent=1 // pred_fallthru
      _
    // Predicated region
    $region10: #{tpu_custom_call.1} parent=1 // pred_check
      _
    $region11: #{tpu_custom_call.1} parent=1 // pred_check_branch
      %24 = sbr.rel (0) target = $region13
    $region12: #{tpu_custom_call.1} parent=1 // pred_region
      %25 = dma.done [#allocation3], 128
    $region13: #{tpu_custom_call.1} parent=1 // pred_fallthru
      _
    %v26 = vld [vmem:[#allocation2] sm:$0xf]
    %v27 = vld [vmem:[#allocation2 + $0x4] sm:$0xf]
    %v28 = vunpack.c.l.bf16 %v26
    %v29 = vunpack.c.l.bf16 %v27
    %v30 = vld [vmem:[%s1] sm:$0x1]
    %v32 = vlaneseq
    %v33 = vshrl.u32 %v32, 7
    %v34 = vsub.s32 0, %v33
    %v35 = vrot.slane %v30, %v34
    %v37 = vmul.f32 %v28, %v35
    %v38 = vmul.f32 %v29, %v35
    %v39 = vpack.c.bf16 %v38, %v37
    %v41 = vunpack.c.l.b16 %v39
    %v42 = vunpack.c.h.b16 %v39
    %v43 = vpack.c.b16 %v41, %v41
    %v44 = vpack.c.b16 %v42, %v42
    %47 = vst [vmem:[#allocation5] sm:$0xf] %v43
    %48 = vst [vmem:[#allocation5 + $0x4] sm:$0xf] %v44
    // Predicated region
    $region14: #{tpu_custom_call.1} parent=1 // pred_check
      _
    $region15: #{tpu_custom_call.1} parent=1 // pred_check_branch
      %50 = sbr.rel (0) target = $region17
    $region16: #{tpu_custom_call.1} parent=1 // pred_region
      %s52 = ssub.s32 128, 128
      %53 = vsyncadd [#allocation4], %s52
      %s54 = sshll.u32 [#allocation5], 4
      %s55 = int_to_ptr.vmem [resolvable:$true] %s54
      %60 = dma.vmem_to_hbm [thread:$0]  %s55, 128, %s2, [#allocation4], 64, 64, 4
    $region17: #{tpu_custom_call.1} parent=1 // pred_fallthru
      _
    // Predicated region
    $region18: #{tpu_custom_call.1} parent=1 // pred_check
      _
    $region19: #{tpu_custom_call.1} parent=1 // pred_check_branch
      %62 = sbr.rel (0) target = $region21
    $region20: #{tpu_custom_call.1} parent=1 // pred_region
      %63 = dma.done [#allocation4], 128
    $region21: #{tpu_custom_call.1} parent=1 // pred_fallthru
      _
    %64 = vsyncpa [#allocation3], 1
    %65 = vsyncpa [#allocation4], 1

</llo_original>
